<compile_context>
chip_gen: v6e
topology: v6e:2x2x1
jax: 0.10.0
libtpu: 0.0.40
codegen_flags: <defaults>
</compile_context>

<pallas_src>
import math

import jax
import jax.numpy as jnp
from jax import lax
from jax.experimental import pallas as pl
from jax.experimental.pallas import tpu as pltpu

SQRT_HALF = 1.0 / math.sqrt(2.0)
GN_EPS = 1e-5


def _erf(x):
    # Abramowitz & Stegun 7.1.26 polynomial, |err| < 1.5e-7.  exp() lands on
    # the EUP slot; the single f32 divide is kept exact so the GELU stays
    # ~1e-6 of nn.GELU() (an approx reciprocal here would cost ~1e-3 once
    # amplified by conv2).
    a1, a2, a3, a4, a5 = (0.254829592, -0.284496736, 1.421413741,
                          -1.453152027, 1.061405429)
    p = 0.3275911
    sgn = jnp.where(x >= 0.0, 1.0, -1.0)
    ax = jnp.abs(x)
    t = 1.0 / (1.0 + p * ax)
    poly = ((((a5 * t + a4) * t + a3) * t + a2) * t + a1) * t
    return sgn * (1.0 - poly * jnp.exp(-ax * ax))


def _gelu_exact(x):
    return 0.5 * x * (1.0 + _erf(x * SQRT_HALF))


def _make_rblock_kernel(height, width, chan, ksize, bsz, multi, compute_dtype):
    hw = height * width
    pad = (ksize - 1) // 2
    kk = ksize * ksize
    n_elem = float(chan * hw)

    # Static per-tap circular shifts: tap (kh, kw) of output pixel s reads
    # input pixel s + d, d = (kh-pad)*W + (kw-pad).  pltpu.roll follows
    # jnp.roll semantics (result[i] = x[i - shift]) => shift = (-d) mod HW.
    shifts = []
    for kh in range(ksize):
        for kw in range(ksize):
            d = (kh - pad) * width + (kw - pad)
            shifts.append((-d) % hw)

    def kernel(x_ref, w1_ref, w2_ref, b1_ref, g_ref, be_ref, b2_ref, m_ref,
               o_ref, patch_ref):
        # Weights / affine params: resident in VMEM, read once per grid step.
        w1 = w1_ref[...]
        w2 = w2_ref[...]
        b1 = b1_ref[...]
        b2 = b2_ref[...]
        gamma = g_ref[...]
        beta = be_ref[...]
        # Per-tap validity masks (1, HW): zero taps whose circular roll
        # wrapped across a row edge or the top/bottom of the image.
        # (On v6e/v7x these could be held in bf16 to halve VPU bytes; kept in
        #  f32 here so the same code runs on v5e's f32-only VALUs.)
        masks = [m_ref[pl.ds(t, 1), :] for t in range(kk)]

        def conv(z32, wmat):
            # Build the im2col patch tap-by-tap straight into the reused
            # compute_dtype scratch: no concatenate, no whole-patch cast.
            for t in range(kk):
                shift = shifts[t]
                if shift == 0:                       # centre tap: mask is all 1
                    tap = z32
                else:
                    tap = pltpu.roll(z32, shift=shift, axis=1) * masks[t]
                patch_ref[t * chan:(t + 1) * chan, :] = tap.astype(compute_dtype)
            # One fused MXU matmul per conv: (C, K*K*C) @ (K*K*C, HW) -> f32.
            return jnp.dot(wmat, patch_ref[...],
                           preferred_element_type=jnp.float32)

        for b in range(bsz):                         # small static unroll
            x = x_ref[b].astype(jnp.float32)         # (C, HW)

            # block1: conv1 + bias + GroupNorm(1 group, per-sample) + GELU
            s = conv(x, w1) + b1
            mean = jnp.sum(s) / n_elem
            cent = s - mean
            var = jnp.sum(cent * cent) / n_elem      # two-pass variance
            y = _gelu_exact(cent * lax.rsqrt(var + GN_EPS) * gamma + beta)

            # attention_type='none' -> identity (NoneLayer)

            # block2: conv2 + bias ; residual: x + multi * res
            r = conv(y, w2) + b2
            o_ref[b] = (x + multi * r).astype(o_ref.dtype)

    return kernel


def _pick_samples_per_block(n, c, hw, budget_bytes=8 << 20, cap=4):
    """Largest divisor of n keeping blocks within budget, the in-kernel unroll
    short, and >= 2 grid steps when n >= 2 (v7x has 2 TensorCores)."""
    per_sample = 2 * 2 * c * hw * 4          # x + out blocks, double buffered
    max_b = max(1, min(cap, budget_bytes // max(per_sample, 1)))
    best = 1
    for b in range(1, n + 1):
        if n % b or b > max_b:
            continue
        if n >= 2 and n // b < 2:
            continue
        best = b
    return best


def rblock_a_forward(x_nchw, params, ksize, multi=0.5,
                     compute_dtype=jnp.bfloat16, samples_per_block=None):
    n, c, h, w = x_nchw.shape
    assert ksize % 2 == 1, "same-padding conv assumes odd kernel size"
    hw = h * w
    kk = ksize * ksize
    pad = (ksize - 1) // 2

    # NCHW -> (N, C, H*W): a free reshape, no transposes / im2col in HBM.
    x_flat = x_nchw.reshape(n, c, hw).astype(jnp.float32)

    def pack_weight(wt):
        # torch (Cout, Cin, K, K) -> (Cout, K*K*Cin), column = (kh*K+kw)*Cin+ci
        return (jnp.transpose(wt, (0, 2, 3, 1))
                .reshape(c, kk * c).astype(compute_dtype))

    w1 = pack_weight(params["w1"])
    w2 = pack_weight(params["w2"])
    b1 = params["b1"].reshape(c, 1).astype(jnp.float32)
    b2 = params["b2"].reshape(c, 1).astype(jnp.float32)
    gamma = params["gamma"].reshape(c, 1).astype(jnp.float32)
    beta = params["beta"].reshape(c, 1).astype(jnp.float32)

    # Per-tap validity masks for the roll-based taps: zero columns whose
    # shifted source pixel lies outside the image (horizontal AND vertical).
    s_idx = jnp.arange(hw, dtype=jnp.int32)
    h_idx, w_idx = s_idx // w, s_idx % w
    rows = []
    for kh in range(ksize):
        for kw in range(ksize):
            dh, dw = kh - pad, kw - pad
            rows.append((h_idx + dh >= 0) & (h_idx + dh < h) &
                        (w_idx + dw >= 0) & (w_idx + dw < w))
    masks = jnp.stack(rows).astype(jnp.float32)              # (K*K, HW)

    bsz = samples_per_block or _pick_samples_per_block(n, c, hw)
    assert n % bsz == 0, "samples_per_block must divide the batch"
    grid = (n // bsz,)

    kernel = _make_rblock_kernel(h, w, c, ksize, bsz, float(multi),
                                 compute_dtype)

    # Explicit scoped-VMEM budget sized to the real working set (+headroom).
    itemsize = jnp.dtype(compute_dtype).itemsize
    need = (2 * (2 * bsz * c * hw * 4)        # double-buffered x / out blocks
            + kk * c * hw * itemsize          # reused im2col patch scratch
            + 4 * c * hw * 4                  # live f32 activations
            + 2 * c * kk * c * itemsize       # resident weights
            + kk * hw * 4 + (1 << 20))        # masks + misc headroom
    vmem_limit = int(min(max(2 * need, 8 << 20), 64 << 20))

    out_flat = pl.pallas_call(
        kernel,
        out_shape=jax.ShapeDtypeStruct((n, c, hw), jnp.float32),
        grid=grid,
        in_specs=[
            pl.BlockSpec((bsz, c, hw), lambda i: (i, 0, 0)),   # x block
            pl.BlockSpec((c, kk * c), lambda i: (0, 0)),       # w1 (resident)
            pl.BlockSpec((c, kk * c), lambda i: (0, 0)),       # w2 (resident)
            pl.BlockSpec((c, 1), lambda i: (0, 0)),            # b1
            pl.BlockSpec((c, 1), lambda i: (0, 0)),            # gamma
            pl.BlockSpec((c, 1), lambda i: (0, 0)),            # beta
            pl.BlockSpec((c, 1), lambda i: (0, 0)),            # b2
            pl.BlockSpec((kk, hw), lambda i: (0, 0)),          # tap masks
        ],
        out_specs=pl.BlockSpec((bsz, c, hw), lambda i: (i, 0, 0)),
        scratch_shapes=[pltpu.VMEM((kk * c, hw), compute_dtype)],
        compiler_params=pltpu.CompilerParams(
            dimension_semantics=("parallel",),
            vmem_limit_bytes=vmem_limit),
    )(x_flat, w1, w2, b1, gamma, beta, b2, masks)

    return out_flat.reshape(n, c, h, w)


def rblock_a_reference(x, params, ksize, multi=0.5):
    """Pure-JAX reference of the PyTorch forward (NCHW)."""
    pad = (ksize - 1) // 2

    def conv(inp, wt, b):
        out = lax.conv_general_dilated(
            inp, wt, (1, 1), [(pad, pad), (pad, pad)],
            dimension_numbers=("NCHW", "OIHW", "NCHW"))
        return out + b[None, :, None, None]

    h = conv(x, params["w1"], params["b1"])
    mean = jnp.mean(h, axis=(1, 2, 3), keepdims=True)
    var = jnp.mean((h - mean) ** 2, axis=(1, 2, 3), keepdims=True)
    h = (h - mean) * lax.rsqrt(var + GN_EPS)
    h = h * params["gamma"][None, :, None, None] + params["beta"][None, :, None, None]
    h = jax.nn.gelu(h, approximate=False)
    h = conv(h, params["w2"], params["b2"])
    return x + multi * h


if __name__ == "__main__":
    N, C, H, W, K = 2, 8, 16, 16, 3
    key = jax.random.PRNGKey(0)
    kx, k1, kb1, k2, kb2 = jax.random.split(key, 5)
    fan = C * K * K

    x = jax.random.normal(kx, (N, C, H, W), jnp.float32)
    params = {
        "w1": jax.random.normal(k1, (C, C, K, K), jnp.float32) / math.sqrt(fan),
        "b1": jax.random.normal(kb1, (C,), jnp.float32) * 0.1,
        "w2": jax.random.normal(k2, (C, C, K, K), jnp.float32) / math.sqrt(fan),
        "b2": jax.random.normal(kb2, (C,), jnp.float32) * 0.1,
        # GroupNorm affine default init: weight=1, bias=0
        "gamma": jnp.ones((C,), jnp.float32),
        "beta": jnp.zeros((C,), jnp.float32),
    }

    ref = rblock_a_reference(x, params, K, multi=0.5)

    # Exact path (f32 matmul operands) -- tight correctness check.
    out_f32 = rblock_a_forward(x, params, K, multi=0.5,
                               compute_dtype=jnp.float32)
    # Fast path (bf16 MXU operands, f32 accumulation / norm / GELU / residual).
    out_bf16 = rblock_a_forward(x, params, K, multi=0.5,
                                compute_dtype=jnp.bfloat16)
    jax.block_until_ready((ref, out_f32, out_bf16))

    assert out_f32.shape == x.shape and out_f32.dtype == x.dtype
    assert out_bf16.shape == x.shape and out_bf16.dtype == x.dtype
    err32 = float(jnp.max(jnp.abs(out_f32 - ref)))
    err16 = float(jnp.max(jnp.abs(out_bf16 - ref)))
    assert err32 < 1e-3, f"f32 max abs err {err32}"
    assert err16 < 5e-2, f"bf16 max abs err {err16}"
    print("KERNEL_OK")
</pallas_src>

<mosaic_0001>
module attributes {stable_mosaic.version = 11 : i64} {
  func.func @kernel(%arg0: i32, %arg1: memref<1x8x256xf32, #tpu.memory_space<vmem>>, %arg2: memref<8x72xf32, #tpu.memory_space<vmem>>, %arg3: memref<8x72xf32, #tpu.memory_space<vmem>>, %arg4: memref<8x1xf32, #tpu.memory_space<vmem>>, %arg5: memref<8x1xf32, #tpu.memory_space<vmem>>, %arg6: memref<8x1xf32, #tpu.memory_space<vmem>>, %arg7: memref<8x1xf32, #tpu.memory_space<vmem>>, %arg8: memref<9x256xf32, #tpu.memory_space<vmem>>, %arg9: memref<1x8x256xf32, #tpu.memory_space<vmem>>, %arg10: memref<72x256xf32, #tpu.memory_space<vmem>>) attributes {dimension_semantics = [#tpu.dimension_semantics<parallel>], iteration_bounds = array<i64: 2>, scalar_prefetch = 0 : i64, scratch_operands = 1 : i64, tpu.core_type = #tpu.core_type<tc>, window_params = [{transform_indices = @transform_0, window_bounds = array<i64: 1, 8, 256>}, {pipeline_mode = #tpu.pipeline_mode<synchronous>, transform_indices = @transform_1, window_bounds = array<i64: 8, 72>}, {pipeline_mode = #tpu.pipeline_mode<synchronous>, transform_indices = @transform_2, window_bounds = array<i64: 8, 72>}, {pipeline_mode = #tpu.pipeline_mode<synchronous>, transform_indices = @transform_3, window_bounds = array<i64: 8, 1>}, {pipeline_mode = #tpu.pipeline_mode<synchronous>, transform_indices = @transform_4, window_bounds = array<i64: 8, 1>}, {pipeline_mode = #tpu.pipeline_mode<synchronous>, transform_indices = @transform_5, window_bounds = array<i64: 8, 1>}, {pipeline_mode = #tpu.pipeline_mode<synchronous>, transform_indices = @transform_6, window_bounds = array<i64: 8, 1>}, {pipeline_mode = #tpu.pipeline_mode<synchronous>, transform_indices = @transform_7, window_bounds = array<i64: 9, 256>}, {transform_indices = @transform_8, window_bounds = array<i64: 1, 8, 256>}]} {
    %c0 = arith.constant 0 : index
    %c0_0 = arith.constant 0 : index
    %0 = vector.load %arg2[%c0, %c0_0] : memref<8x72xf32, #tpu.memory_space<vmem>>, vector<8x72xf32>
    %c0_1 = arith.constant 0 : index
    %c0_2 = arith.constant 0 : index
    %1 = vector.load %arg3[%c0_1, %c0_2] : memref<8x72xf32, #tpu.memory_space<vmem>>, vector<8x72xf32>
    %c0_3 = arith.constant 0 : index
    %c0_4 = arith.constant 0 : index
    %2 = vector.load %arg4[%c0_3, %c0_4] : memref<8x1xf32, #tpu.memory_space<vmem>>, vector<8x1xf32>
    %c0_5 = arith.constant 0 : index
    %c0_6 = arith.constant 0 : index
    %3 = vector.load %arg7[%c0_5, %c0_6] : memref<8x1xf32, #tpu.memory_space<vmem>>, vector<8x1xf32>
    %c0_7 = arith.constant 0 : index
    %c0_8 = arith.constant 0 : index
    %4 = vector.load %arg5[%c0_7, %c0_8] : memref<8x1xf32, #tpu.memory_space<vmem>>, vector<8x1xf32>
    %c0_9 = arith.constant 0 : index
    %c0_10 = arith.constant 0 : index
    %5 = vector.load %arg6[%c0_9, %c0_10] : memref<8x1xf32, #tpu.memory_space<vmem>>, vector<8x1xf32>
    %c0_11 = arith.constant 0 : index
    %c0_12 = arith.constant 0 : index
    %6 = vector.load %arg8[%c0_11, %c0_12] : memref<9x256xf32, #tpu.memory_space<vmem>>, vector<1x256xf32>
    %c1 = arith.constant 1 : index
    %c0_13 = arith.constant 0 : index
    %7 = vector.load %arg8[%c1, %c0_13] : memref<9x256xf32, #tpu.memory_space<vmem>>, vector<1x256xf32>
    %c2 = arith.constant 2 : index
    %c0_14 = arith.constant 0 : index
    %8 = vector.load %arg8[%c2, %c0_14] : memref<9x256xf32, #tpu.memory_space<vmem>>, vector<1x256xf32>
    %c3 = arith.constant 3 : index
    %c0_15 = arith.constant 0 : index
    %9 = vector.load %arg8[%c3, %c0_15] : memref<9x256xf32, #tpu.memory_space<vmem>>, vector<1x256xf32>
    %c5 = arith.constant 5 : index
    %c0_16 = arith.constant 0 : index
    %10 = vector.load %arg8[%c5, %c0_16] : memref<9x256xf32, #tpu.memory_space<vmem>>, vector<1x256xf32>
    %c6 = arith.constant 6 : index
    %c0_17 = arith.constant 0 : index
    %11 = vector.load %arg8[%c6, %c0_17] : memref<9x256xf32, #tpu.memory_space<vmem>>, vector<1x256xf32>
    %c7 = arith.constant 7 : index
    %c0_18 = arith.constant 0 : index
    %12 = vector.load %arg8[%c7, %c0_18] : memref<9x256xf32, #tpu.memory_space<vmem>>, vector<1x256xf32>
    %c8 = arith.constant 8 : index
    %c0_19 = arith.constant 0 : index
    %13 = vector.load %arg8[%c8, %c0_19] : memref<9x256xf32, #tpu.memory_space<vmem>>, vector<1x256xf32>
    %c0_20 = arith.constant 0 : index
    %c0_21 = arith.constant 0 : index
    %c0_22 = arith.constant 0 : index
    %14 = vector.load %arg1[%c0_20, %c0_21, %c0_22] : memref<1x8x256xf32, #tpu.memory_space<vmem>>, vector<1x8x256xf32>
    %15 = vector.shape_cast %14 : vector<1x8x256xf32> to vector<8x256xf32>
    %c17_i32 = arith.constant 17 : i32
    %16 = tpu.dynamic_rotate %15 by %c17_i32 dim 1 : vector<8x256xf32>, i32 -> vector<8x256xf32>
    %17 = vector.broadcast %6 : vector<1x256xf32> to vector<8x256xf32>
    %18 = arith.mulf %16, %17 : vector<8x256xf32>
    %c0_23 = arith.constant 0 : index
    %c0_24 = arith.constant 0 : index
    %19 = vector.load %arg10[%c0_23, %c0_24] : memref<72x256xf32, #tpu.memory_space<vmem>>, vector<8x256xf32>
    tpu.vector_store %arg10[%c0_23, %c0_24], %18 {strides = array<i32>} : memref<72x256xf32, #tpu.memory_space<vmem>>, vector<8x256xf32>,
    %c16_i32 = arith.constant 16 : i32
    %20 = tpu.dynamic_rotate %15 by %c16_i32 dim 1 : vector<8x256xf32>, i32 -> vector<8x256xf32>
    %21 = vector.broadcast %7 : vector<1x256xf32> to vector<8x256xf32>
    %22 = arith.mulf %20, %21 : vector<8x256xf32>
    %c8_25 = arith.constant 8 : index
    %c0_26 = arith.constant 0 : index
    %23 = vector.load %arg10[%c8_25, %c0_26] : memref<72x256xf32, #tpu.memory_space<vmem>>, vector<8x256xf32>
    tpu.vector_store %arg10[%c8_25, %c0_26], %22 {strides = array<i32>} : memref<72x256xf32, #tpu.memory_space<vmem>>, vector<8x256xf32>,
    %c15_i32 = arith.constant 15 : i32
    %24 = tpu.dynamic_rotate %15 by %c15_i32 dim 1 : vector<8x256xf32>, i32 -> vector<8x256xf32>
    %25 = vector.broadcast %8 : vector<1x256xf32> to vector<8x256xf32>
    %26 = arith.mulf %24, %25 : vector<8x256xf32>
    %c16 = arith.constant 16 : index
    %c0_27 = arith.constant 0 : index
    %27 = vector.load %arg10[%c16, %c0_27] : memref<72x256xf32, #tpu.memory_space<vmem>>, vector<8x256xf32>
    tpu.vector_store %arg10[%c16, %c0_27], %26 {strides = array<i32>} : memref<72x256xf32, #tpu.memory_space<vmem>>, vector<8x256xf32>,
    %c1_i32 = arith.constant 1 : i32
    %28 = tpu.dynamic_rotate %15 by %c1_i32 dim 1 : vector<8x256xf32>, i32 -> vector<8x256xf32>
    %29 = vector.broadcast %9 : vector<1x256xf32> to vector<8x256xf32>
    %30 = arith.mulf %28, %29 : vector<8x256xf32>
    %c24 = arith.constant 24 : index
    %c0_28 = arith.constant 0 : index
    %31 = vector.load %arg10[%c24, %c0_28] : memref<72x256xf32, #tpu.memory_space<vmem>>, vector<8x256xf32>
    tpu.vector_store %arg10[%c24, %c0_28], %30 {strides = array<i32>} : memref<72x256xf32, #tpu.memory_space<vmem>>, vector<8x256xf32>,
    %c32 = arith.constant 32 : index
    %c0_29 = arith.constant 0 : index
    %32 = vector.load %arg10[%c32, %c0_29] : memref<72x256xf32, #tpu.memory_space<vmem>>, vector<8x256xf32>
    tpu.vector_store %arg10[%c32, %c0_29], %15 {strides = array<i32>} : memref<72x256xf32, #tpu.memory_space<vmem>>, vector<8x256xf32>,
    %c255_i32 = arith.constant 255 : i32
    %33 = tpu.dynamic_rotate %15 by %c255_i32 dim 1 : vector<8x256xf32>, i32 -> vector<8x256xf32>
    %34 = vector.broadcast %10 : vector<1x256xf32> to vector<8x256xf32>
    %35 = arith.mulf %33, %34 : vector<8x256xf32>
    %c40 = arith.constant 40 : index
    %c0_30 = arith.constant 0 : index
    %36 = vector.load %arg10[%c40, %c0_30] : memref<72x256xf32, #tpu.memory_space<vmem>>, vector<8x256xf32>
    tpu.vector_store %arg10[%c40, %c0_30], %35 {strides = array<i32>} : memref<72x256xf32, #tpu.memory_space<vmem>>, vector<8x256xf32>,
    %c241_i32 = arith.constant 241 : i32
    %37 = tpu.dynamic_rotate %15 by %c241_i32 dim 1 : vector<8x256xf32>, i32 -> vector<8x256xf32>
    %38 = vector.broadcast %11 : vector<1x256xf32> to vector<8x256xf32>
    %39 = arith.mulf %37, %38 : vector<8x256xf32>
    %c48 = arith.constant 48 : index
    %c0_31 = arith.constant 0 : index
    %40 = vector.load %arg10[%c48, %c0_31] : memref<72x256xf32, #tpu.memory_space<vmem>>, vector<8x256xf32>
    tpu.vector_store %arg10[%c48, %c0_31], %39 {strides = array<i32>} : memref<72x256xf32, #tpu.memory_space<vmem>>, vector<8x256xf32>,
    %c240_i32 = arith.constant 240 : i32
    %41 = tpu.dynamic_rotate %15 by %c240_i32 dim 1 : vector<8x256xf32>, i32 -> vector<8x256xf32>
    %42 = vector.broadcast %12 : vector<1x256xf32> to vector<8x256xf32>
    %43 = arith.mulf %41, %42 : vector<8x256xf32>
    %c56 = arith.constant 56 : index
    %c0_32 = arith.constant 0 : index
    %44 = vector.load %arg10[%c56, %c0_32] : memref<72x256xf32, #tpu.memory_space<vmem>>, vector<8x256xf32>
    tpu.vector_store %arg10[%c56, %c0_32], %43 {strides = array<i32>} : memref<72x256xf32, #tpu.memory_space<vmem>>, vector<8x256xf32>,
    %c239_i32 = arith.constant 239 : i32
    %45 = tpu.dynamic_rotate %15 by %c239_i32 dim 1 : vector<8x256xf32>, i32 -> vector<8x256xf32>
    %46 = vector.broadcast %13 : vector<1x256xf32> to vector<8x256xf32>
    %47 = arith.mulf %45, %46 : vector<8x256xf32>
    %c64 = arith.constant 64 : index
    %c0_33 = arith.constant 0 : index
    %48 = vector.load %arg10[%c64, %c0_33] : memref<72x256xf32, #tpu.memory_space<vmem>>, vector<8x256xf32>
    tpu.vector_store %arg10[%c64, %c0_33], %47 {strides = array<i32>} : memref<72x256xf32, #tpu.memory_space<vmem>>, vector<8x256xf32>,
    %c0_34 = arith.constant 0 : index
    %c0_35 = arith.constant 0 : index
    %49 = vector.load %arg10[%c0_34, %c0_35] : memref<72x256xf32, #tpu.memory_space<vmem>>, vector<72x256xf32>
    %cst = arith.constant dense<0.000000e+00> : vector<8x256xf32>
    %50 = tpu.matmul %0, %49, %cst {dimension_numbers = #tpu.dot_dimension_numbers<[1], [0], [0], [1], [0, 0, 1, 1], [], []>} : vector<8x72xf32>, vector<72x256xf32>, vector<8x256xf32> -> vector<8x256xf32>
    %51 = vector.broadcast %2 : vector<8x1xf32> to vector<8x256xf32>
    %52 = arith.addf %50, %51 : vector<8x256xf32>
    %53 = vector.shape_cast %52 : vector<8x256xf32> to vector<1x8x256xf32>
    %cst_36 = arith.constant dense<0.000000e+00> : vector<1xf32>
    %54 = vector.multi_reduction <add>, %53, %cst_36 [1, 2] : vector<1x8x256xf32> to vector<1xf32>
    %55 = vector.shape_cast %54 : vector<1xf32> to vector<1x1x1xf32>
    %56 = vector.extract %55[0, 0, 0] : f32 from vector<1x1x1xf32>
    %cst_37 = arith.constant 2.048000e+03 : f32
    %57 = arith.divf %56, %cst_37 : f32
    %58 = vector.broadcast %57 : f32 to vector<8x256xf32>
    %59 = arith.subf %52, %58 : vector<8x256xf32>
    %60 = arith.mulf %59, %59 : vector<8x256xf32>
    %61 = vector.shape_cast %60 : vector<8x256xf32> to vector<1x8x256xf32>
    %cst_38 = arith.constant dense<0.000000e+00> : vector<1xf32>
    %62 = vector.multi_reduction <add>, %61, %cst_38 [1, 2] : vector<1x8x256xf32> to vector<1xf32>
    %63 = vector.shape_cast %62 : vector<1xf32> to vector<1x1x1xf32>
    %64 = vector.extract %63[0, 0, 0] : f32 from vector<1x1x1xf32>
    %cst_39 = arith.constant 2.048000e+03 : f32
    %65 = arith.divf %64, %cst_39 : f32
    %cst_40 = arith.constant 9.99999974E-6 : f32
    %66 = arith.addf %65, %cst_40 : f32
    %67 = math.rsqrt %66 : f32
    %68 = vector.broadcast %67 : f32 to vector<8x256xf32>
    %69 = arith.mulf %59, %68 : vector<8x256xf32>
    %70 = vector.broadcast %4 : vector<8x1xf32> to vector<8x256xf32>
    %71 = arith.mulf %69, %70 : vector<8x256xf32>
    %72 = vector.broadcast %5 : vector<8x1xf32> to vector<8x256xf32>
    %73 = arith.addf %71, %72 : vector<8x256xf32>
    %cst_41 = arith.constant 5.000000e-01 : f32
    %74 = vector.broadcast %cst_41 : f32 to vector<8x256xf32>
    %75 = arith.mulf %74, %73 : vector<8x256xf32>
    %cst_42 = arith.constant 0.707106769 : f32
    %76 = vector.broadcast %cst_42 : f32 to vector<8x256xf32>
    %77 = arith.mulf %73, %76 : vector<8x256xf32>
    %cst_43 = arith.constant 0.000000e+00 : f32
    %78 = vector.broadcast %cst_43 : f32 to vector<8x256xf32>
    %79 = arith.cmpf oge, %77, %78 : vector<8x256xf32>
    %cst_44 = arith.constant 1.000000e+00 : f32
    %cst_45 = arith.constant -1.000000e+00 : f32
    %80 = vector.broadcast %cst_44 : f32 to vector<8x256xf32>
    %81 = vector.broadcast %cst_45 : f32 to vector<8x256xf32>
    %82 = arith.select %79, %80, %81 : vector<8x256xi1>, vector<8x256xf32>
    %83 = math.absf %77 : vector<8x256xf32>
    %cst_46 = arith.constant 0.327591091 : f32
    %84 = vector.broadcast %cst_46 : f32 to vector<8x256xf32>
    %85 = arith.mulf %84, %83 : vector<8x256xf32>
    %cst_47 = arith.constant 1.000000e+00 : f32
    %86 = vector.broadcast %cst_47 : f32 to vector<8x256xf32>
    %87 = arith.addf %86, %85 : vector<8x256xf32>
    %cst_48 = arith.constant 1.000000e+00 : f32
    %88 = vector.broadcast %cst_48 : f32 to vector<8x256xf32>
    %89 = arith.divf %88, %87 : vector<8x256xf32>
    %cst_49 = arith.constant 1.06140542 : f32
    %90 = vector.broadcast %cst_49 : f32 to vector<8x256xf32>
    %91 = arith.mulf %90, %89 : vector<8x256xf32>
    %cst_50 = arith.constant -1.45315206 : f32
    %92 = vector.broadcast %cst_50 : f32 to vector<8x256xf32>
    %93 = arith.addf %91, %92 : vector<8x256xf32>
    %94 = arith.mulf %93, %89 : vector<8x256xf32>
    %cst_51 = arith.constant 1.42141378 : f32
    %95 = vector.broadcast %cst_51 : f32 to vector<8x256xf32>
    %96 = arith.addf %94, %95 : vector<8x256xf32>
    %97 = arith.mulf %96, %89 : vector<8x256xf32>
    %cst_52 = arith.constant -0.284496725 : f32
    %98 = vector.broadcast %cst_52 : f32 to vector<8x256xf32>
    %99 = arith.addf %97, %98 : vector<8x256xf32>
    %100 = arith.mulf %99, %89 : vector<8x256xf32>
    %cst_53 = arith.constant 0.254829586 : f32
    %101 = vector.broadcast %cst_53 : f32 to vector<8x256xf32>
    %102 = arith.addf %100, %101 : vector<8x256xf32>
    %103 = arith.mulf %102, %89 : vector<8x256xf32>
    %cst_54 = arith.constant 0.000000e+00 : f32
    %104 = vector.broadcast %cst_54 : f32 to vector<8x256xf32>
    %105 = arith.subf %104, %83 : vector<8x256xf32>
    %106 = arith.mulf %105, %83 : vector<8x256xf32>
    %107 = math.exp %106 : vector<8x256xf32>
    %108 = arith.mulf %103, %107 : vector<8x256xf32>
    %cst_55 = arith.constant 1.000000e+00 : f32
    %109 = vector.broadcast %cst_55 : f32 to vector<8x256xf32>
    %110 = arith.subf %109, %108 : vector<8x256xf32>
    %111 = arith.mulf %82, %110 : vector<8x256xf32>
    %cst_56 = arith.constant 1.000000e+00 : f32
    %112 = vector.broadcast %cst_56 : f32 to vector<8x256xf32>
    %113 = arith.addf %112, %111 : vector<8x256xf32>
    %114 = arith.mulf %75, %113 : vector<8x256xf32>
    %c17_i32_57 = arith.constant 17 : i32
    %115 = tpu.dynamic_rotate %114 by %c17_i32_57 dim 1 : vector<8x256xf32>, i32 -> vector<8x256xf32>
    %116 = vector.broadcast %6 : vector<1x256xf32> to vector<8x256xf32>
    %117 = arith.mulf %115, %116 : vector<8x256xf32>
    %c0_58 = arith.constant 0 : index
    %c0_59 = arith.constant 0 : index
    %118 = vector.load %arg10[%c0_58, %c0_59] : memref<72x256xf32, #tpu.memory_space<vmem>>, vector<8x256xf32>
    tpu.vector_store %arg10[%c0_58, %c0_59], %117 {strides = array<i32>} : memref<72x256xf32, #tpu.memory_space<vmem>>, vector<8x256xf32>,
    %c16_i32_60 = arith.constant 16 : i32
    %119 = tpu.dynamic_rotate %114 by %c16_i32_60 dim 1 : vector<8x256xf32>, i32 -> vector<8x256xf32>
    %120 = vector.broadcast %7 : vector<1x256xf32> to vector<8x256xf32>
    %121 = arith.mulf %119, %120 : vector<8x256xf32>
    %c8_61 = arith.constant 8 : index
    %c0_62 = arith.constant 0 : index
    %122 = vector.load %arg10[%c8_61, %c0_62] : memref<72x256xf32, #tpu.memory_space<vmem>>, vector<8x256xf32>
    tpu.vector_store %arg10[%c8_61, %c0_62], %121 {strides = array<i32>} : memref<72x256xf32, #tpu.memory_space<vmem>>, vector<8x256xf32>,
    %c15_i32_63 = arith.constant 15 : i32
    %123 = tpu.dynamic_rotate %114 by %c15_i32_63 dim 1 : vector<8x256xf32>, i32 -> vector<8x256xf32>
    %124 = vector.broadcast %8 : vector<1x256xf32> to vector<8x256xf32>
    %125 = arith.mulf %123, %124 : vector<8x256xf32>
    %c16_64 = arith.constant 16 : index
    %c0_65 = arith.constant 0 : index
    %126 = vector.load %arg10[%c16_64, %c0_65] : memref<72x256xf32, #tpu.memory_space<vmem>>, vector<8x256xf32>
    tpu.vector_store %arg10[%c16_64, %c0_65], %125 {strides = array<i32>} : memref<72x256xf32, #tpu.memory_space<vmem>>, vector<8x256xf32>,
    %c1_i32_66 = arith.constant 1 : i32
    %127 = tpu.dynamic_rotate %114 by %c1_i32_66 dim 1 : vector<8x256xf32>, i32 -> vector<8x256xf32>
    %128 = vector.broadcast %9 : vector<1x256xf32> to vector<8x256xf32>
    %129 = arith.mulf %127, %128 : vector<8x256xf32>
    %c24_67 = arith.constant 24 : index
    %c0_68 = arith.constant 0 : index
    %130 = vector.load %arg10[%c24_67, %c0_68] : memref<72x256xf32, #tpu.memory_space<vmem>>, vector<8x256xf32>
    tpu.vector_store %arg10[%c24_67, %c0_68], %129 {strides = array<i32>} : memref<72x256xf32, #tpu.memory_space<vmem>>, vector<8x256xf32>,
    %c32_69 = arith.constant 32 : index
    %c0_70 = arith.constant 0 : index
    %131 = vector.load %arg10[%c32_69, %c0_70] : memref<72x256xf32, #tpu.memory_space<vmem>>, vector<8x256xf32>
    tpu.vector_store %arg10[%c32_69, %c0_70], %114 {strides = array<i32>} : memref<72x256xf32, #tpu.memory_space<vmem>>, vector<8x256xf32>,
    %c255_i32_71 = arith.constant 255 : i32
    %132 = tpu.dynamic_rotate %114 by %c255_i32_71 dim 1 : vector<8x256xf32>, i32 -> vector<8x256xf32>
    %133 = vector.broadcast %10 : vector<1x256xf32> to vector<8x256xf32>
    %134 = arith.mulf %132, %133 : vector<8x256xf32>
    %c40_72 = arith.constant 40 : index
    %c0_73 = arith.constant 0 : index
    %135 = vector.load %arg10[%c40_72, %c0_73] : memref<72x256xf32, #tpu.memory_space<vmem>>, vector<8x256xf32>
    tpu.vector_store %arg10[%c40_72, %c0_73], %134 {strides = array<i32>} : memref<72x256xf32, #tpu.memory_space<vmem>>, vector<8x256xf32>,
    %c241_i32_74 = arith.constant 241 : i32
    %136 = tpu.dynamic_rotate %114 by %c241_i32_74 dim 1 : vector<8x256xf32>, i32 -> vector<8x256xf32>
    %137 = vector.broadcast %11 : vector<1x256xf32> to vector<8x256xf32>
    %138 = arith.mulf %136, %137 : vector<8x256xf32>
    %c48_75 = arith.constant 48 : index
    %c0_76 = arith.constant 0 : index
    %139 = vector.load %arg10[%c48_75, %c0_76] : memref<72x256xf32, #tpu.memory_space<vmem>>, vector<8x256xf32>
    tpu.vector_store %arg10[%c48_75, %c0_76], %138 {strides = array<i32>} : memref<72x256xf32, #tpu.memory_space<vmem>>, vector<8x256xf32>,
    %c240_i32_77 = arith.constant 240 : i32
    %140 = tpu.dynamic_rotate %114 by %c240_i32_77 dim 1 : vector<8x256xf32>, i32 -> vector<8x256xf32>
    %141 = vector.broadcast %12 : vector<1x256xf32> to vector<8x256xf32>
    %142 = arith.mulf %140, %141 : vector<8x256xf32>
    %c56_78 = arith.constant 56 : index
    %c0_79 = arith.constant 0 : index
    %143 = vector.load %arg10[%c56_78, %c0_79] : memref<72x256xf32, #tpu.memory_space<vmem>>, vector<8x256xf32>
    tpu.vector_store %arg10[%c56_78, %c0_79], %142 {strides = array<i32>} : memref<72x256xf32, #tpu.memory_space<vmem>>, vector<8x256xf32>,
    %c239_i32_80 = arith.constant 239 : i32
    %144 = tpu.dynamic_rotate %114 by %c239_i32_80 dim 1 : vector<8x256xf32>, i32 -> vector<8x256xf32>
    %145 = vector.broadcast %13 : vector<1x256xf32> to vector<8x256xf32>
    %146 = arith.mulf %144, %145 : vector<8x256xf32>
    %c64_81 = arith.constant 64 : index
    %c0_82 = arith.constant 0 : index
    %147 = vector.load %arg10[%c64_81, %c0_82] : memref<72x256xf32, #tpu.memory_space<vmem>>, vector<8x256xf32>
    tpu.vector_store %arg10[%c64_81, %c0_82], %146 {strides = array<i32>} : memref<72x256xf32, #tpu.memory_space<vmem>>, vector<8x256xf32>,
    %c0_83 = arith.constant 0 : index
    %c0_84 = arith.constant 0 : index
    %148 = vector.load %arg10[%c0_83, %c0_84] : memref<72x256xf32, #tpu.memory_space<vmem>>, vector<72x256xf32>
    %cst_85 = arith.constant dense<0.000000e+00> : vector<8x256xf32>
    %149 = tpu.matmul %1, %148, %cst_85 {dimension_numbers = #tpu.dot_dimension_numbers<[1], [0], [0], [1], [0, 0, 1, 1], [], []>} : vector<8x72xf32>, vector<72x256xf32>, vector<8x256xf32> -> vector<8x256xf32>
    %150 = vector.broadcast %3 : vector<8x1xf32> to vector<8x256xf32>
    %151 = arith.addf %149, %150 : vector<8x256xf32>
    %cst_86 = arith.constant 5.000000e-01 : f32
    %152 = vector.broadcast %cst_86 : f32 to vector<8x256xf32>
    %153 = arith.mulf %152, %151 : vector<8x256xf32>
    %154 = arith.addf %15, %153 : vector<8x256xf32>
    %c0_87 = arith.constant 0 : index
    %c0_88 = arith.constant 0 : index
    %c0_89 = arith.constant 0 : index
    %155 = vector.load %arg9[%c0_87, %c0_88, %c0_89] : memref<1x8x256xf32, #tpu.memory_space<vmem>>, vector<1x8x256xf32>
    %156 = vector.shape_cast %155 : vector<1x8x256xf32> to vector<8x256xf32>
    %157 = vector.shape_cast %154 : vector<8x256xf32> to vector<1x8x256xf32>
    tpu.vector_store %arg9[%c0_87, %c0_88, %c0_89], %157 {strides = array<i32>} : memref<1x8x256xf32, #tpu.memory_space<vmem>>, vector<1x8x256xf32>,
    return
  }
  func.func @transform_0(%arg0: i32) -> (i32, i32, i32) {
    %c0_i32 = arith.constant 0 : i32
    %c0_i32_0 = arith.constant 0 : i32
    %c0_i32_1 = arith.constant 0 : i32
    return %arg0, %c0_i32, %c0_i32_0 : i32, i32, i32
  }
  func.func @transform_1(%arg0: i32) -> (i32, i32) {
    %c0_i32 = arith.constant 0 : i32
    %c0_i32_0 = arith.constant 0 : i32
    %c0_i32_1 = arith.constant 0 : i32
    return %c0_i32, %c0_i32_0 : i32, i32
  }
  func.func @transform_2(%arg0: i32) -> (i32, i32) {
    %c0_i32 = arith.constant 0 : i32
    %c0_i32_0 = arith.constant 0 : i32
    %c0_i32_1 = arith.constant 0 : i32
    return %c0_i32, %c0_i32_0 : i32, i32
  }
  func.func @transform_3(%arg0: i32) -> (i32, i32) {
    %c0_i32 = arith.constant 0 : i32
    %c0_i32_0 = arith.constant 0 : i32
    %c0_i32_1 = arith.constant 0 : i32
    return %c0_i32, %c0_i32_0 : i32, i32
  }
  func.func @transform_4(%arg0: i32) -> (i32, i32) {
    %c0_i32 = arith.constant 0 : i32
    %c0_i32_0 = arith.constant 0 : i32
    %c0_i32_1 = arith.constant 0 : i32
    return %c0_i32, %c0_i32_0 : i32, i32
  }
  func.func @transform_5(%arg0: i32) -> (i32, i32) {
    %c0_i32 = arith.constant 0 : i32
    %c0_i32_0 = arith.constant 0 : i32
    %c0_i32_1 = arith.constant 0 : i32
    return %c0_i32, %c0_i32_0 : i32, i32
  }
  func.func @transform_6(%arg0: i32) -> (i32, i32) {
    %c0_i32 = arith.constant 0 : i32
    %c0_i32_0 = arith.constant 0 : i32
    %c0_i32_1 = arith.constant 0 : i32
    return %c0_i32, %c0_i32_0 : i32, i32
  }
  func.func @transform_7(%arg0: i32) -> (i32, i32) {
    %c0_i32 = arith.constant 0 : i32
    %c0_i32_0 = arith.constant 0 : i32
    %c0_i32_1 = arith.constant 0 : i32
    return %c0_i32, %c0_i32_0 : i32, i32
  }
  func.func @transform_8(%arg0: i32) -> (i32, i32, i32) {
    %c0_i32 = arith.constant 0 : i32
    %c0_i32_0 = arith.constant 0 : i32
    %c0_i32_1 = arith.constant 0 : i32
    return %arg0, %c0_i32, %c0_i32_0 : i32, i32, i32
  }
}

</mosaic_0001>

<llo_original>
// kernel: tpu_custom_call.1
$region0: #{tpu_custom_call.1}
  #allocation0 [shape = 'u32[]', space=smem, size = 0x4, offset = 0x4, fixed_abs, tag = 'smem constant byte address 0x4 - core index']
  #allocation1 [shape = 'u32[144,128]{1,0:T(1,128)}', space=vmem, size = 0x12000, scoped, tag = 'internal scratch']
  #allocation2 [shape = 'f32[72,256]{1,0:T(8,128)}', space=vmem, size = 0x12000, scoped, tag = 'scratch operand']
  %s0 = inlined_call_operand.vmem [shape: f32[2,8,256], index: 0, kind: input, shape index: {}]
  %s1 = inlined_call_operand.hbm [shape: f32[8,72], index: 1, kind: input, shape index: {}]
  %s2 = inlined_call_operand.hbm [shape: f32[8,72], index: 2, kind: input, shape index: {}]
  %s3 = inlined_call_operand.vmem [shape: f32[8,1], index: 3, kind: input, shape index: {}]
  %s4 = inlined_call_operand.vmem [shape: f32[8,1], index: 4, kind: input, shape index: {}]
  %s5 = inlined_call_operand.vmem [shape: f32[8,1], index: 5, kind: input, shape index: {}]
  %s6 = inlined_call_operand.vmem [shape: f32[8,1], index: 6, kind: input, shape index: {}]
  %s7 = inlined_call_operand.hbm [shape: f32[9,256], index: 7, kind: input, shape index: {}]
  %s8 = inlined_call_operand.hbm [shape: f32[2,8,256], index: 8, kind: output, shape index: {}]
  %s9 = sld [smem:[#allocation0]]
  $region77: #{tpu_custom_call.1} parent=0
    _
  %s11 = ssub.s32 1, %s9
  %s12 = scalar_select 0, %s11, %s9
  $region1: #{tpu_custom_call.1} parent=0
    #allocation3 [shape = 'u8[4096]{0}', space=vmem, size = 0x1000, scoped, tag = 'input window, operand 1, single buffered']
    #allocation4 [shape = 's32[2]{0}', space=sflag, size = 0x8, scoped, tag = 'scoped memory for tpu_custom_call.1']
    #allocation5 [shape = 's32[2]{0}', space=sflag, size = 0x8, scoped, tag = 'scoped memory for tpu_custom_call.1']
    #allocation6 [shape = 'u8[4096]{0}', space=vmem, size = 0x1000, scoped, tag = 'input window, operand 2, single buffered']
    #allocation7 [shape = 's32[1]{0}', space=sflag, size = 0x4, scoped, tag = 'scoped memory for tpu_custom_call.1']
    #allocation8 [shape = 'u8[16384]{0}', space=vmem, size = 0x4000, scoped, tag = 'input window, operand 7, single buffered']
    #allocation9 [shape = 'u8[16384]{0}', space=vmem, size = 0x4000, scoped, tag = 'output window, operand 0']
    %13 = vsyncpa [#allocation4], 0
    %14 = vsyncpa [#allocation7], 0
    %15 = vsyncpa [#allocation5], 0
    %s16 = scalar_lea.sflag [#allocation5], 1
    %17 = vsyncpa %s16, 0
    loop: start=0, step=1, limit=4
    $region2: #{tpu_custom_call.1} parent=1 // loop_pre_header
      _
    $region3: #{tpu_custom_call.1} parent=1 // loop_header
      %s19 = sphi 0, %s23
      %p20 = scmp.ge.s32.totalorder %s19, 4
      %s29 = sphi 0, %s31
      %s32 = sphi 0, %s29
      %s33 = sphi 0, %s32
      %s49 = sphi 0, %s33
      %s53 = sphi 0, %s53
      %s55 = sphi 0, %s53
      %s56 = sphi 0, %s55
      %s70 = sphi 0, %s56
      %s74 = sphi 0, %s74
      %s76 = sphi 0, %s74
      %s77 = sphi 0, %s76
      %s91 = sphi 0, %s77
      %s95 = sphi 0, %s95
      %s97 = sphi 0, %s95
      %s98 = sphi 0, %s97
      %s112 = sphi 0, %s98
      %s116 = sphi 0, %s116
      %s118 = sphi 0, %s116
      %s119 = sphi 0, %s118
      %s133 = sphi 0, %s119
      %s137 = sphi 0, %s137
      %s139 = sphi 0, %s137
      %s140 = sphi 0, %s139
      %s154 = sphi 0, %s140
      %s158 = sphi 0, %s158
      %s160 = sphi 0, %s158
      %s161 = sphi 0, %s160
      %s175 = sphi 0, %s161
      %s179 = sphi 0, %s179
      %s181 = sphi 0, %s179
      %s182 = sphi 0, %s181
      %s196 = sphi 0, %s182
      %s202 = sphi 0, %s204
      %s205 = sphi 0, %s202
      %s206 = sphi 0, %s205
      %s222 = sphi 0, %s206
    $region4: #{tpu_custom_call.1} parent=1 // loop_header_branch
      %22 = sbr.rel (%p20) target = $region8
    $region5: #{tpu_custom_call.1} parent=1 // loop_body
      %s24 = ssub.s32 %s19, 1
      %s25 = ssub.s32 %s19, 2
      %s26 = sadd.s32 %s19, 1
      %s27 = ssub.s32 %s19, %s26
      %p28 = scmp.eq.s32.totalorder %s27, 0
      %s30 = sadd.s32 %s29, 1
      %s31 = scalar_select %p28, %s29, %s30
      %p34 = pneg %p28
      %p35 = scmp.eq.s32.totalorder %s19, 1
      %p36 = por %p34, %p35
      %p37 = scmp.ne.s32.totalorder %s29, %s32
      %p38 = scmp.eq.s32.totalorder %s19, 0
      %p39 = por %p37, %p38
      %p40 = scmp.ne.s32.totalorder %s29, %s32
      %p41 = scmp.eq.s32.totalorder %s24, 1
      %p42 = por %p40, %p41
      %p43 = scmp.ne.s32.totalorder %s32, %s33
      %p44 = scmp.eq.s32.totalorder %s24, 0
      %p45 = por %p43, %p44
      %p46 = scmp.ne.s32.totalorder %s32, %s33
      %p47 = scmp.eq.s32.totalorder %s25, 1
      %p48 = por %p46, %p47
      %p50 = scmp.ne.s32.totalorder %s33, %s49
      %p51 = scmp.eq.s32.totalorder %s25, 0
      %p52 = por %p50, %p51
      %s54 = sadd.s32 %s53, 1
      %p57 = scmp.eq.s32.totalorder %s19, 1
      %p58 = scmp.ne.s32.totalorder %s53, %s55
      %p59 = scmp.eq.s32.totalorder %s19, 0
      %p60 = por %p58, %p59
      %p61 = scmp.ne.s32.totalorder %s53, %s55
      %p62 = scmp.eq.s32.totalorder %s24, 1
      %p63 = por %p61, %p62
      %p64 = scmp.ne.s32.totalorder %s55, %s56
      %p65 = scmp.eq.s32.totalorder %s24, 0
      %p66 = por %p64, %p65
      %p67 = scmp.ne.s32.totalorder %s55, %s56
      %p68 = scmp.eq.s32.totalorder %s25, 1
      %p69 = por %p67, %p68
      %p71 = scmp.ne.s32.totalorder %s56, %s70
      %p72 = scmp.eq.s32.totalorder %s25, 0
      %p73 = por %p71, %p72
      %s75 = sadd.s32 %s74, 1
      %p78 = scmp.eq.s32.totalorder %s19, 1
      %p79 = scmp.ne.s32.totalorder %s74, %s76
      %p80 = scmp.eq.s32.totalorder %s19, 0
      %p81 = por %p79, %p80
      %p82 = scmp.ne.s32.totalorder %s74, %s76
      %p83 = scmp.eq.s32.totalorder %s24, 1
      %p84 = por %p82, %p83
      %p85 = scmp.ne.s32.totalorder %s76, %s77
      %p86 = scmp.eq.s32.totalorder %s24, 0
      %p87 = por %p85, %p86
      %p88 = scmp.ne.s32.totalorder %s76, %s77
      %p89 = scmp.eq.s32.totalorder %s25, 1
      %p90 = por %p88, %p89
      %p92 = scmp.ne.s32.totalorder %s77, %s91
      %p93 = scmp.eq.s32.totalorder %s25, 0
      %p94 = por %p92, %p93
      %s96 = sadd.s32 %s95, 1
      %p99 = scmp.eq.s32.totalorder %s19, 1
      %p100 = scmp.ne.s32.totalorder %s95, %s97
      %p101 = scmp.eq.s32.totalorder %s19, 0
      %p102 = por %p100, %p101
      %p103 = scmp.ne.s32.totalorder %s95, %s97
      %p104 = scmp.eq.s32.totalorder %s24, 1
      %p105 = por %p103, %p104
      %p106 = scmp.ne.s32.totalorder %s97, %s98
      %p107 = scmp.eq.s32.totalorder %s24, 0
      %p108 = por %p106, %p107
      %p109 = scmp.ne.s32.totalorder %s97, %s98
      %p110 = scmp.eq.s32.totalorder %s25, 1
      %p111 = por %p109, %p110
      %p113 = scmp.ne.s32.totalorder %s98, %s112
      %p114 = scmp.eq.s32.totalorder %s25, 0
      %p115 = por %p113, %p114
      %s117 = sadd.s32 %s116, 1
      %p120 = scmp.eq.s32.totalorder %s19, 1
      %p121 = scmp.ne.s32.totalorder %s116, %s118
      %p122 = scmp.eq.s32.totalorder %s19, 0
      %p123 = por %p121, %p122
      %p124 = scmp.ne.s32.totalorder %s116, %s118
      %p125 = scmp.eq.s32.totalorder %s24, 1
      %p126 = por %p124, %p125
      %p127 = scmp.ne.s32.totalorder %s118, %s119
      %p128 = scmp.eq.s32.totalorder %s24, 0
      %p129 = por %p127, %p128
      %p130 = scmp.ne.s32.totalorder %s118, %s119
      %p131 = scmp.eq.s32.totalorder %s25, 1
      %p132 = por %p130, %p131
      %p134 = scmp.ne.s32.totalorder %s119, %s133
      %p135 = scmp.eq.s32.totalorder %s25, 0
      %p136 = por %p134, %p135
      %s138 = sadd.s32 %s137, 1
      %p141 = scmp.eq.s32.totalorder %s19, 1
      %p142 = scmp.ne.s32.totalorder %s137, %s139
      %p143 = scmp.eq.s32.totalorder %s19, 0
      %p144 = por %p142, %p143
      %p145 = scmp.ne.s32.totalorder %s137, %s139
      %p146 = scmp.eq.s32.totalorder %s24, 1
      %p147 = por %p145, %p146
      %p148 = scmp.ne.s32.totalorder %s139, %s140
      %p149 = scmp.eq.s32.totalorder %s24, 0
      %p150 = por %p148, %p149
      %p151 = scmp.ne.s32.totalorder %s139, %s140
      %p152 = scmp.eq.s32.totalorder %s25, 1
      %p153 = por %p151, %p152
      %p155 = scmp.ne.s32.totalorder %s140, %s154
      %p156 = scmp.eq.s32.totalorder %s25, 0
      %p157 = por %p155, %p156
      %s159 = sadd.s32 %s158, 1
      %p162 = scmp.eq.s32.totalorder %s19, 1
      %p163 = scmp.ne.s32.totalorder %s158, %s160
      %p164 = scmp.eq.s32.totalorder %s19, 0
      %p165 = por %p163, %p164
      %p166 = scmp.ne.s32.totalorder %s158, %s160
      %p167 = scmp.eq.s32.totalorder %s24, 1
      %p168 = por %p166, %p167
      %p169 = scmp.ne.s32.totalorder %s160, %s161
      %p170 = scmp.eq.s32.totalorder %s24, 0
      %p171 = por %p169, %p170
      %p172 = scmp.ne.s32.totalorder %s160, %s161
      %p173 = scmp.eq.s32.totalorder %s25, 1
      %p174 = por %p172, %p173
      %p176 = scmp.ne.s32.totalorder %s161, %s175
      %p177 = scmp.eq.s32.totalorder %s25, 0
      %p178 = por %p176, %p177
      %s180 = sadd.s32 %s179, 1
      %p183 = scmp.eq.s32.totalorder %s19, 1
      %p184 = scmp.ne.s32.totalorder %s179, %s181
      %p185 = scmp.eq.s32.totalorder %s19, 0
      %p186 = por %p184, %p185
      %p187 = scmp.ne.s32.totalorder %s179, %s181
      %p188 = scmp.eq.s32.totalorder %s24, 1
      %p189 = por %p187, %p188
      %p190 = scmp.ne.s32.totalorder %s181, %s182
      %p191 = scmp.eq.s32.totalorder %s24, 0
      %p192 = por %p190, %p191
      %p193 = scmp.ne.s32.totalorder %s181, %s182
      %p194 = scmp.eq.s32.totalorder %s25, 1
      %p195 = por %p193, %p194
      %p197 = scmp.ne.s32.totalorder %s182, %s196
      %p198 = scmp.eq.s32.totalorder %s25, 0
      %p199 = por %p197, %p198
      %s200 = ssub.s32 %s19, %s26
      %p201 = scmp.eq.s32.totalorder %s200, 0
      %s203 = sadd.s32 %s202, 1
      %s204 = scalar_select %p201, %s202, %s203
      %p207 = pneg %p201
      %p208 = scmp.eq.s32.totalorder %s19, 1
      %p209 = por %p207, %p208
      %p210 = scmp.ne.s32.totalorder %s202, %s205
      %p211 = scmp.eq.s32.totalorder %s19, 0
      %p212 = por %p210, %p211
      %p213 = scmp.ne.s32.totalorder %s202, %s205
      %p214 = scmp.eq.s32.totalorder %s24, 1
      %p215 = por %p213, %p214
      %p216 = scmp.ne.s32.totalorder %s205, %s206
      %p217 = scmp.eq.s32.totalorder %s24, 0
      %p218 = por %p216, %p217
      %p219 = scmp.ne.s32.totalorder %s205, %s206
      %p220 = scmp.eq.s32.totalorder %s25, 1
      %p221 = por %p219, %p220
      %p223 = scmp.ne.s32.totalorder %s206, %s222
      %p224 = scmp.eq.s32.totalorder %s25, 0
      %p225 = por %p223, %p224
      %p226 = scmp.le.s32.totalorder 1, %s19
      %p227 = scmp.lt.s32.totalorder %s19, 3
      %p228 = pnand %p226, %p227
      %p229 = pneg %p228
      // Predicated region
      $region9: #{tpu_custom_call.1} parent=5 // pred_check
        _
      $region10: #{tpu_custom_call.1} parent=5 // pred_check_branch
        %231 = sbr.rel (%p228) target = $region12
      $region11: #{tpu_custom_call.1} parent=5 // pred_region
        %s232 = ssub.s32 %s19, 1
        // Predicated region
        $region13: #{tpu_custom_call.1} parent=11 // pred_check
          %p233 = pneg %p66
        $region14: #{tpu_custom_call.1} parent=11 // pred_check_branch
          %235 = sbr.rel (%p233) target = $region16
        $region15: #{tpu_custom_call.1} parent=11 // pred_region
          %s237 = ssub.s32 128, 128
          %238 = vsyncadd [#allocation4], %s237
          %s240 = sshll.u32 [#allocation3], 4
          %s241 = int_to_ptr.vmem [resolvable:$true] %s240
          %243 = dma.hbm_to_vmem [thread:$0]  %s1, 128, %s241, [#allocation4]
        $region16: #{tpu_custom_call.1} parent=11 // pred_fallthru
          _
        // Predicated region
        $region17: #{tpu_custom_call.1} parent=11 // pred_check
          %p244 = pneg %p87
        $region18: #{tpu_custom_call.1} parent=11 // pred_check_branch
          %246 = sbr.rel (%p244) target = $region20
        $region19: #{tpu_custom_call.1} parent=11 // pred_region
          %s248 = ssub.s32 128, 128
          %249 = vsyncadd [#allocation7], %s248
          %s251 = sshll.u32 [#allocation6], 4
          %s252 = int_to_ptr.vmem [resolvable:$true] %s251
          %254 = dma.hbm_to_vmem [thread:$0]  %s2, 128, %s252, [#allocation7]
        $region20: #{tpu_custom_call.1} parent=11 // pred_fallthru
          _
        // Predicated region
        $region21: #{tpu_custom_call.1} parent=11 // pred_check
          %p255 = pneg %p108
        $region22: #{tpu_custom_call.1} parent=11 // pred_check_branch
          %257 = sbr.rel (%p255) target = $region24
        $region23: #{tpu_custom_call.1} parent=11 // pred_region
          _
        $region24: #{tpu_custom_call.1} parent=11 // pred_fallthru
          _
        // Predicated region
        $region25: #{tpu_custom_call.1} parent=11 // pred_check
          %p258 = pneg %p129
        $region26: #{tpu_custom_call.1} parent=11 // pred_check_branch
          %260 = sbr.rel (%p258) target = $region28
        $region27: #{tpu_custom_call.1} parent=11 // pred_region
          _
        $region28: #{tpu_custom_call.1} parent=11 // pred_fallthru
          _
        // Predicated region
        $region29: #{tpu_custom_call.1} parent=11 // pred_check
          %p261 = pneg %p150
        $region30: #{tpu_custom_call.1} parent=11 // pred_check_branch
          %263 = sbr.rel (%p261) target = $region32
        $region31: #{tpu_custom_call.1} parent=11 // pred_region
          _
        $region32: #{tpu_custom_call.1} parent=11 // pred_fallthru
          _
        // Predicated region
        $region33: #{tpu_custom_call.1} parent=11 // pred_check
          %p264 = pneg %p171
        $region34: #{tpu_custom_call.1} parent=11 // pred_check_branch
          %266 = sbr.rel (%p264) target = $region36
        $region35: #{tpu_custom_call.1} parent=11 // pred_region
          _
        $region36: #{tpu_custom_call.1} parent=11 // pred_fallthru
          _
        // Predicated region
        $region37: #{tpu_custom_call.1} parent=11 // pred_check
          %p267 = pneg %p192
        $region38: #{tpu_custom_call.1} parent=11 // pred_check_branch
          %269 = sbr.rel (%p267) target = $region40
        $region39: #{tpu_custom_call.1} parent=11 // pred_region
          %s271 = ssub.s32 512, 512
          %272 = vsyncadd [#allocation7], %s271
          %s273 = sshll.u32 [#allocation8], 4
          %s274 = int_to_ptr.vmem [resolvable:$true] %s273
          %279 = dma.hbm_to_vmem [thread:$0]  %s7, 512, %s274, [#allocation7], 256, 256, 16
        $region40: #{tpu_custom_call.1} parent=11 // pred_fallthru
          _
      $region12: #{tpu_custom_call.1} parent=5 // pred_fallthru
        _
      %p280 = scmp.lt.s32.totalorder %s19, 2
      // Predicated region
      $region41: #{tpu_custom_call.1} parent=5 // pred_check
        %p281 = pneg %p280
      $region42: #{tpu_custom_call.1} parent=5 // pred_check_branch
        %283 = sbr.rel (%p281) target = $region44
      $region43: #{tpu_custom_call.1} parent=5 // pred_region
        // Predicated region
        $region45: #{tpu_custom_call.1} parent=43 // pred_check
          %p284 = pneg %p39
        $region46: #{tpu_custom_call.1} parent=43 // pred_check_branch
          %286 = sbr.rel (%p284) target = $region48
        $region47: #{tpu_custom_call.1} parent=43 // pred_region
          %p287 = scmp.lt.s32.totalorder %s19, 1
          %s288 = scalar_select %p287, %s19, 1
          %s289 = smul.addr %s288, 2
          %s290 = smul.addr %s289, 8
          %s291 = scalar_lea.vmem %s0, %s290
        $region48: #{tpu_custom_call.1} parent=43 // pred_fallthru
          _
      $region44: #{tpu_custom_call.1} parent=5 // pred_fallthru
        _
      %p292 = scmp.le.s32.totalorder 1, %s19
      %p293 = scmp.lt.s32.totalorder %s19, 3
      %p294 = pnand %p292, %p293
      %p295 = pneg %p294
      // Predicated region
      $region49: #{tpu_custom_call.1} parent=5 // pred_check
        _
      $region50: #{tpu_custom_call.1} parent=5 // pred_check_branch
        %297 = sbr.rel (%p294) target = $region52
      $region51: #{tpu_custom_call.1} parent=5 // pred_region
        %s298 = ssub.s32 %s19, 1
        // Predicated region
        $region53: #{tpu_custom_call.1} parent=51 // pred_check
          %p299 = pneg %p66
        $region54: #{tpu_custom_call.1} parent=51 // pred_check_branch
          %301 = sbr.rel (%p299) target = $region56
        $region55: #{tpu_custom_call.1} parent=51 // pred_region
          %302 = dma.done [#allocation4], 128
        $region56: #{tpu_custom_call.1} parent=51 // pred_fallthru
          _
        // Predicated region
        $region57: #{tpu_custom_call.1} parent=51 // pred_check
          %p303 = pneg %p87
        $region58: #{tpu_custom_call.1} parent=51 // pred_check_branch
          %305 = sbr.rel (%p303) target = $region60
        $region59: #{tpu_custom_call.1} parent=51 // pred_region
          %306 = dma.done [#allocation7], 128
        $region60: #{tpu_custom_call.1} parent=51 // pred_fallthru
          _
        // Predicated region
        $region61: #{tpu_custom_call.1} parent=51 // pred_check
          %p307 = pneg %p192
        $region62: #{tpu_custom_call.1} parent=51 // pred_check_branch
          %309 = sbr.rel (%p307) target = $region64
        $region63: #{tpu_custom_call.1} parent=51 // pred_region
          %310 = dma.done [#allocation7], 512
        $region64: #{tpu_custom_call.1} parent=51 // pred_fallthru
          _
        %p311 = scmp.lt.s32.totalorder %s24, 1
        %s312 = scalar_select %p311, %s24, 1
        %s313 = smul.addr %s312, 2
        %s314 = smul.addr %s313, 8
        %s315 = scalar_lea.vmem %s0, %s314
        %p316 = pneg %p45
        %p317 = pneg %p42
        %p318 = pneg %p66
        %p319 = pneg %p63
        %p320 = pneg %p87
        %p321 = pneg %p84
        %p322 = pneg %p108
        %p323 = pneg %p105
        %p324 = pneg %p129
        %p325 = pneg %p126
        %p326 = pneg %p150
        %p327 = pneg %p147
        %p328 = pneg %p171
        %p329 = pneg %p168
        %p330 = pneg %p192
        %p331 = pneg %p189
        %p332 = pneg %p218
        %p333 = pneg %p215
        %s334 = sand.u32 %s205, 1
        %s335 = scalar_lea.sflag [#allocation5], %s334
        %s336 = sand.u32 %s205, 1
        %s337 = smul.addr %s336, 16
        %s338 = scalar_lea.vmem [#allocation9], %s337
        %p339 = scmp.lt.s32.totalorder %s24, 1
        %s340 = scalar_select %p339, %s24, 1
        %s341 = smul.addr %s340, 2
        %s342 = smul.addr %s341, 8
        %s343 = scalar_lea.vmem %s0, %s342
        %v344 = vld [vmem:[#allocation3] sm:$0xff]
        %v345 = vld [vmem:[#allocation6] sm:$0xff]
        %v346 = vld [vmem:[%s3] sm:$0xff]
        %v347 = vld [vmem:[%s6] sm:$0xff]
        %v348 = vld [vmem:[%s4] sm:$0xff]
        %v349 = vld [vmem:[%s5] sm:$0xff]
        %v350 = vld [vmem:[#allocation8] ss:$8 sm:$0x3]
        %s351 = scalar_lea.vmem [#allocation8], 1
        %v352 = vld [vmem:[%s351] ss:$8 sm:$0x3]
        %s353 = scalar_lea.vmem [#allocation8], 2
        %v354 = vld [vmem:[%s353] ss:$8 sm:$0x3]
        %s355 = scalar_lea.vmem [#allocation8], 3
        %v356 = vld [vmem:[%s355] ss:$8 sm:$0x3]
        %s357 = scalar_lea.vmem [#allocation8], 5
        %v358 = vld [vmem:[%s357] ss:$8 sm:$0x3]
        %s359 = scalar_lea.vmem [#allocation8], 6
        %v360 = vld [vmem:[%s359] ss:$8 sm:$0x3]
        %s361 = scalar_lea.vmem [#allocation8], 7
        %v362 = vld [vmem:[%s361] ss:$8 sm:$0x3]
        %s363 = scalar_lea.vmem [#allocation8], 16
        %v364 = vld [vmem:[%s363] ss:$8 sm:$0x3]
        %v365 = vld [vmem:[%s343] sm:$0xff]
        %v366 = vld [vmem:[%s343 + $0x8] sm:$0xff]
        %367 = vrot.lane.b32.xlu0 %v365, 17
        %v368 = vpop.permute.xlu0 %367
        %369 = vrot.lane.b32.xlu0 %v366, 17
        %v370 = vpop.permute.xlu0 %369
        %v371 = vlaneseq
        %v372 = vand.u32 %v371, 127
        %vm373 = vcmp.lt.s32.totalorder %v372, 17
        %v374 = vsel %vm373, %v368, %v370
        %v375 = vsel %vm373, %v370, %v368
        %v377 = vlaneseq
        %v378 = vshrl.u32 %v377, 7
        %v379 = vsub.s32 0, %v378
        %v380 = vrot.slane %v350, %v379
        %v381 = vlaneseq
        %v382 = vshrl.u32 %v381, 7
        %v383 = vsub.s32 1, %v382
        %v384 = vrot.slane %v350, %v383
        %v387 = vmul.f32 %v375, %v380
        %v388 = vmul.f32 %v374, %v384
        %389 = vst [vmem:[#allocation2] sm:$0xff] %v387
        %390 = vst [vmem:[#allocation2 + $0x8] sm:$0xff] %v388
        %391 = vrot.lane.b32.xlu0 %v365, 16
        %v392 = vpop.permute.xlu0 %391
        %393 = vrot.lane.b32.xlu0 %v366, 16
        %v394 = vpop.permute.xlu0 %393
        %vm395 = vcmp.lt.s32.totalorder %v372, 16
        %v396 = vsel %vm395, %v392, %v394
        %v397 = vsel %vm395, %v394, %v392
        %v399 = vlaneseq
        %v400 = vshrl.u32 %v399, 7
        %v401 = vsub.s32 0, %v400
        %v402 = vrot.slane %v352, %v401
        %v403 = vlaneseq
        %v404 = vshrl.u32 %v403, 7
        %v405 = vsub.s32 1, %v404
        %v406 = vrot.slane %v352, %v405
        %v409 = vmul.f32 %v397, %v402
        %v410 = vmul.f32 %v396, %v406
        %411 = vst [vmem:[#allocation2 + $0x10] sm:$0xff] %v409
        %412 = vst [vmem:[#allocation2 + $0x18] sm:$0xff] %v410
        %413 = vrot.lane.b32.xlu0 %v365, 15
        %v414 = vpop.permute.xlu0 %413
        %415 = vrot.lane.b32.xlu0 %v366, 15
        %v416 = vpop.permute.xlu0 %415
        %vm417 = vcmp.lt.s32.totalorder %v372, 15
        %v418 = vsel %vm417, %v414, %v416
        %v419 = vsel %vm417, %v416, %v414
        %v421 = vlaneseq
        %v422 = vshrl.u32 %v421, 7
        %v423 = vsub.s32 0, %v422
        %v424 = vrot.slane %v354, %v423
        %v425 = vlaneseq
        %v426 = vshrl.u32 %v425, 7
        %v427 = vsub.s32 1, %v426
        %v428 = vrot.slane %v354, %v427
        %v431 = vmul.f32 %v419, %v424
        %v432 = vmul.f32 %v418, %v428
        %433 = vst [vmem:[#allocation2 + $0x20] sm:$0xff] %v431
        %434 = vst [vmem:[#allocation2 + $0x28] sm:$0xff] %v432
        %435 = vrot.lane.b32.xlu0 %v365, 1
        %v436 = vpop.permute.xlu0 %435
        %437 = vrot.lane.b32.xlu0 %v366, 1
        %v438 = vpop.permute.xlu0 %437
        %vm439 = vcmp.lt.s32.totalorder %v372, 1
        %v440 = vsel %vm439, %v436, %v438
        %v441 = vsel %vm439, %v438, %v436
        %v443 = vlaneseq
        %v444 = vshrl.u32 %v443, 7
        %v445 = vsub.s32 0, %v444
        %v446 = vrot.slane %v356, %v445
        %v447 = vlaneseq
        %v448 = vshrl.u32 %v447, 7
        %v449 = vsub.s32 1, %v448
        %v450 = vrot.slane %v356, %v449
        %v453 = vmul.f32 %v441, %v446
        %v454 = vmul.f32 %v440, %v450
        %455 = vst [vmem:[#allocation2 + $0x30] sm:$0xff] %v453
        %456 = vst [vmem:[#allocation2 + $0x38] sm:$0xff] %v454
        %457 = vst [vmem:[#allocation2 + $0x40] sm:$0xff] %v365
        %458 = vst [vmem:[#allocation2 + $0x48] sm:$0xff] %v366
        %459 = vrot.lane.b32.xlu0 %v365, 127
        %v460 = vpop.permute.xlu0 %459
        %461 = vrot.lane.b32.xlu0 %v366, 127
        %v462 = vpop.permute.xlu0 %461
        %vm463 = vcmp.lt.s32.totalorder %v372, 127
        %v464 = vsel %vm463, %v460, %v462
        %v465 = vsel %vm463, %v462, %v460
        %v467 = vlaneseq
        %v468 = vshrl.u32 %v467, 7
        %v469 = vsub.s32 0, %v468
        %v470 = vrot.slane %v358, %v469
        %v471 = vlaneseq
        %v472 = vshrl.u32 %v471, 7
        %v473 = vsub.s32 1, %v472
        %v474 = vrot.slane %v358, %v473
        %v477 = vmul.f32 %v464, %v470
        %v478 = vmul.f32 %v465, %v474
        %479 = vst [vmem:[#allocation2 + $0x50] sm:$0xff] %v477
        %480 = vst [vmem:[#allocation2 + $0x58] sm:$0xff] %v478
        %481 = vrot.lane.b32.xlu0 %v365, 113
        %v482 = vpop.permute.xlu0 %481
        %483 = vrot.lane.b32.xlu0 %v366, 113
        %v484 = vpop.permute.xlu0 %483
        %vm485 = vcmp.lt.s32.totalorder %v372, 113
        %v486 = vsel %vm485, %v482, %v484
        %v487 = vsel %vm485, %v484, %v482
        %v489 = vlaneseq
        %v490 = vshrl.u32 %v489, 7
        %v491 = vsub.s32 0, %v490
        %v492 = vrot.slane %v360, %v491
        %v493 = vlaneseq
        %v494 = vshrl.u32 %v493, 7
        %v495 = vsub.s32 1, %v494
        %v496 = vrot.slane %v360, %v495
        %v499 = vmul.f32 %v486, %v492
        %v500 = vmul.f32 %v487, %v496
        %501 = vst [vmem:[#allocation2 + $0x60] sm:$0xff] %v499
        %502 = vst [vmem:[#allocation2 + $0x68] sm:$0xff] %v500
        %503 = vrot.lane.b32.xlu0 %v365, 112
        %v504 = vpop.permute.xlu0 %503
        %505 = vrot.lane.b32.xlu0 %v366, 112
        %v506 = vpop.permute.xlu0 %505
        %vm507 = vcmp.lt.s32.totalorder %v372, 112
        %v508 = vsel %vm507, %v504, %v506
        %v509 = vsel %vm507, %v506, %v504
        %v511 = vlaneseq
        %v512 = vshrl.u32 %v511, 7
        %v513 = vsub.s32 0, %v512
        %v514 = vrot.slane %v362, %v513
        %v515 = vlaneseq
        %v516 = vshrl.u32 %v515, 7
        %v517 = vsub.s32 1, %v516
        %v518 = vrot.slane %v362, %v517
        %v521 = vmul.f32 %v508, %v514
        %v522 = vmul.f32 %v509, %v518
        %523 = vst [vmem:[#allocation2 + $0x70] sm:$0xff] %v521
        %524 = vst [vmem:[#allocation2 + $0x78] sm:$0xff] %v522
        %525 = vrot.lane.b32.xlu0 %v365, 111
        %v526 = vpop.permute.xlu0 %525
        %527 = vrot.lane.b32.xlu0 %v366, 111
        %v528 = vpop.permute.xlu0 %527
        %vm529 = vcmp.lt.s32.totalorder %v372, 111
        %v530 = vsel %vm529, %v526, %v528
        %v531 = vsel %vm529, %v528, %v526
        %v533 = vlaneseq
        %v534 = vshrl.u32 %v533, 7
        %v535 = vsub.s32 0, %v534
        %v536 = vrot.slane %v364, %v535
        %v537 = vlaneseq
        %v538 = vshrl.u32 %v537, 7
        %v539 = vsub.s32 1, %v538
        %v540 = vrot.slane %v364, %v539
        %v543 = vmul.f32 %v530, %v536
        %v544 = vmul.f32 %v531, %v540
        %545 = vst [vmem:[#allocation2 + $0x80] sm:$0xff] %v543
        %546 = vst [vmem:[#allocation2 + $0x88] sm:$0xff] %v544
        %v547 = vld [vmem:[#allocation2] sm:$0xff]
        %v548 = vld [vmem:[#allocation2 + $0x8] sm:$0xff]
        %v549 = vld [vmem:[#allocation2 + $0x10] sm:$0xff]
        %v550 = vld [vmem:[#allocation2 + $0x18] sm:$0xff]
        %v551 = vld [vmem:[#allocation2 + $0x20] sm:$0xff]
        %v552 = vld [vmem:[#allocation2 + $0x28] sm:$0xff]
        %v553 = vld [vmem:[#allocation2 + $0x30] sm:$0xff]
        %v554 = vld [vmem:[#allocation2 + $0x38] sm:$0xff]
        %v555 = vld [vmem:[#allocation2 + $0x40] sm:$0xff]
        %v556 = vld [vmem:[#allocation2 + $0x48] sm:$0xff]
        %v557 = vld [vmem:[#allocation2 + $0x50] sm:$0xff]
        %v558 = vld [vmem:[#allocation2 + $0x58] sm:$0xff]
        %v559 = vld [vmem:[#allocation2 + $0x60] sm:$0xff]
        %v560 = vld [vmem:[#allocation2 + $0x68] sm:$0xff]
        %v561 = vld [vmem:[#allocation2 + $0x70] sm:$0xff]
        %v562 = vld [vmem:[#allocation2 + $0x78] sm:$0xff]
        %v563 = vld [vmem:[#allocation2 + $0x80] sm:$0xff]
        %v564 = vld [vmem:[#allocation2 + $0x88] sm:$0xff]
        %566 = vset.pattern.permute.xlu0 0
        %567 = vperm.xlu0 %566, %v346
        %v568 = vpop.permute.xlu0 %567
        %vm570 = vcmask 588800
        %v572 = vsel %vm570, %v344, 0
        %574 = vmatprep.subr.mxu0 0.0
        %575 = vmatpush1.msra.mxu0 0.0
        %576 = vmatprep.subr.mxu0 0.0
        %577 = vmatpush1.msra.mxu0 0.0
        %578 = vmatprep.subr.mxu0 0.0
        %579 = vmatpush1.msra.mxu0 0.0
        %580 = vmatprep.subr.mxu0 0.0
        %581 = vmatpush1.msra.mxu0 0.0
        %582 = vmatprep.subr.mxu0 0.0
        %583 = vmatpush1.msra.mxu0 0.0
        %584 = vmatprep.subr.mxu0 0.0
        %585 = vmatpush1.msra.mxu0 0.0
        %586 = vmatprep.subr.mxu0 0.0
        %587 = vmatpush1.msra.mxu0 0.0
        %588 = vmatprep.subr.mxu0 %v564
        %589 = vmatpush1.msra.mxu0 %v563
        %590 = vmatprep.subr.mxu0 %v562
        %591 = vmatpush1.msra.mxu0 %v561
        %592 = vmatprep.subr.mxu0 %v560
        %593 = vmatpush1.msra.mxu0 %v559
        %594 = vmatprep.subr.mxu0 %v558
        %595 = vmatpush1.msra.mxu0 %v557
        %596 = vmatprep.subr.mxu0 %v556
        %597 = vmatpush1.msra.mxu0 %v555
        %598 = vmatprep.subr.mxu0 %v554
        %599 = vmatpush1.msra.mxu0 %v553
        %600 = vmatprep.subr.mxu0 %v552
        %601 = vmatpush1.msra.mxu0 %v551
        %602 = vmatprep.subr.mxu0 %v550
        %603 = vmatpush1.msra.mxu0 %v549
        %604 = vmatprep.subr.mxu0 %v548
        %605 = vmatpush1.msra.mxu0 %v547
        %606 = vmatprep.subr.mxu0 0.0
        %607 = vmatpush2.msra.mxu0 0.0
        %608 = vmatprep.subr.mxu0 0.0
        %609 = vmatpush2.msra.mxu0 0.0
        %610 = vmatprep.subr.mxu0 0.0
        %611 = vmatpush2.msra.mxu0 0.0
        %612 = vmatprep.subr.mxu0 0.0
        %613 = vmatpush2.msra.mxu0 0.0
        %614 = vmatprep.subr.mxu0 0.0
        %615 = vmatpush2.msra.mxu0 0.0
        %616 = vmatprep.subr.mxu0 0.0
        %617 = vmatpush2.msra.mxu0 0.0
        %618 = vmatprep.subr.mxu0 0.0
        %619 = vmatpush2.msra.mxu0 0.0
        %620 = vmatprep.subr.mxu0 0.0
        %621 = vmatpush2.msra.mxu0 0.0
        %622 = vmatprep.subr.mxu0 0.0
        %623 = vmatpush2.msra.mxu0 0.0
        %624 = vmatprep.subr.mxu0 0.0
        %625 = vmatpush2.msra.mxu0 0.0
        %626 = vmatprep.subr.mxu0 0.0
        %627 = vmatpush2.msra.mxu0 0.0
        %628 = vmatprep.subr.mxu0 0.0
        %629 = vmatpush2.msra.mxu0 0.0
        %630 = vmatprep.subr.mxu0 0.0
        %631 = vmatpush2.msra.mxu0 0.0
        %632 = vmatprep.subr.mxu0 0.0
        %633 = vmatpush2.msra.mxu0 0.0
        %634 = vmatprep.subr.mxu0 0.0
        %635 = vmatpush2.msra.mxu0 0.0
        %636 = vmatprep.subr.mxu0 0.0
        %637 = vmatpush2.msra.mxu0 0.0
        %638 = vmatprep.mubr.f32.mxu0 0.0
        %639 = vmatmul.mubr.f32.gmra.mxu0 %v572
        %v640 = vpop.f32.mrf.mxu0
        %v641 = vadd.f32 %v568, %v640
        %v642 = vpop.f32.mrf.mxu0
        %v643 = vadd.f32 %v568, %v642
        %644 = vdwg.mxu0
        %v645 = vadd.f32 %v641, %v643
        %646 = vadd.xlane.f32.xlu0 %v645
        %v647 = vpop.xlane.xlu0 %646
        %v648 = vrot.slane %v647, 4
        %v649 = vadd.f32 %v647, %v648
        %v650 = vrot.slane %v649, 2
        %v651 = vadd.f32 %v649, %v650
        %v652 = vrot.slane %v651, 1
        %v653 = vadd.f32 %v651, %v652
        %s654 = vtos %v653
        %v655 = vrcp.pop 2048.0
        %s656 = vtos %v655
        %s657 = smul.f32 %s654, %s656
        %v658 = vstv %s657
        %v659 = vsub.f32 %v641, %v658
        %v660 = vsub.f32 %v643, %v658
        %v661 = vmul.f32 %v659, %v659
        %v662 = vmul.f32 %v660, %v660
        %v663 = vadd.f32 %v661, %v662
        %664 = vadd.xlane.f32.xlu0 %v663
        %v665 = vpop.xlane.xlu0 %664
        %v666 = vrot.slane %v665, 4
        %v667 = vadd.f32 %v665, %v666
        %v668 = vrot.slane %v667, 2
        %v669 = vadd.f32 %v667, %v668
        %v670 = vrot.slane %v669, 1
        %v671 = vadd.f32 %v669, %v670
        %s672 = vtos %v671
        %v673 = vrcp.pop 2048.0
        %s674 = vtos %v673
        %s675 = smul.f32 %s672, %s674
        %s676 = sadd.f32 %s675, 1e-05
        %v677 = vstv %s676
        %v678 = vrsqrt.pop %v677
        %s679 = vtos %v678
        %v680 = vstv %s679
        %v681 = vmul.f32 %v659, %v680
        %v682 = vmul.f32 %v660, %v680
        %684 = vset.pattern.permute.xlu0 0
        %685 = vperm.xlu0 %684, %v348
        %v686 = vpop.permute.xlu0 %685
        %v688 = vmul.f32 %v681, %v686
        %v689 = vmul.f32 %v682, %v686
        %691 = vset.pattern.permute.xlu0 0
        %692 = vperm.xlu0 %691, %v349
        %v693 = vpop.permute.xlu0 %692
        %v695 = vadd.f32 %v688, %v693
        %v696 = vadd.f32 %v689, %v693
        %v697 = vmul.f32 %v695, 0.5
        %v698 = vmul.f32 %v696, 0.5
        %v699 = vmul.f32 %v695, 0.70710677
        %v700 = vmul.f32 %v696, 0.70710677
        %vm701 = vcmp.ge.f32.partialorder %v699, 0.0
        %vm702 = vcmp.ge.f32.partialorder %v700, 0.0
        %v703 = vsel %vm701, 1.0, -1.0
        %v704 = vsel %vm702, 1.0, -1.0
        %v705 = vand.u32 2147483647, %v699
        %v706 = vand.u32 2147483647, %v700
        %v707 = vmul.f32 %v705, 0.3275911
        %v708 = vmul.f32 %v706, 0.3275911
        %v709 = vadd.f32 %v707, 1.0
        %v710 = vadd.f32 %v708, 1.0
        %v711 = vrcp.pop %v709
        %v712 = vmul.f32 1.0, %v711
        %v713 = vrcp.pop %v710
        %v714 = vmul.f32 1.0, %v713
        %v715 = vmul.f32 %v712, 1.0614054
        %v716 = vmul.f32 %v714, 1.0614054
        %v717 = vadd.f32 %v715, -1.4531521
        %v718 = vadd.f32 %v716, -1.4531521
        %v719 = vmul.f32 %v717, %v712
        %v720 = vmul.f32 %v718, %v714
        %v721 = vadd.f32 %v719, 1.4214138
        %v722 = vadd.f32 %v720, 1.4214138
        %v723 = vmul.f32 %v721, %v712
        %v724 = vmul.f32 %v722, %v714
        %v725 = vadd.f32 %v723, -0.28449672
        %v726 = vadd.f32 %v724, -0.28449672
        %v727 = vmul.f32 %v725, %v712
        %v728 = vmul.f32 %v726, %v714
        %v729 = vadd.f32 %v727, 0.2548296
        %v730 = vadd.f32 %v728, 0.2548296
        %v731 = vmul.f32 %v729, %v712
        %v732 = vmul.f32 %v730, %v714
        %v733 = vsub.f32 0.0, %v705
        %v734 = vsub.f32 0.0, %v706
        %v735 = vmul.f32 %v733, %v705
        %v736 = vmul.f32 %v734, %v706
        %v737 = vmul.f32 %v735, 1.442695
        %v738 = vpow.pop %v737
        %v739 = vmul.f32 %v736, 1.442695
        %v740 = vpow.pop %v739
        %v741 = vmul.f32 %v731, %v738
        %v742 = vmul.f32 %v732, %v740
        %v743 = vsub.f32 1.0, %v741
        %v744 = vsub.f32 1.0, %v742
        %v745 = vmul.f32 %v703, %v743
        %v746 = vmul.f32 %v704, %v744
        %v747 = vadd.f32 %v745, 1.0
        %v748 = vadd.f32 %v746, 1.0
        %v749 = vmul.f32 %v697, %v747
        %v750 = vmul.f32 %v698, %v748
        %751 = vrot.lane.b32.xlu0 %v749, 17
        %v752 = vpop.permute.xlu0 %751
        %753 = vrot.lane.b32.xlu0 %v750, 17
        %v754 = vpop.permute.xlu0 %753
        %v755 = vsel %vm373, %v752, %v754
        %v756 = vsel %vm373, %v754, %v752
        %v757 = vmul.f32 %v756, %v380
        %v758 = vmul.f32 %v755, %v384
        %759 = vst [vmem:[#allocation2] sm:$0xff] %v757
        %760 = vst [vmem:[#allocation2 + $0x8] sm:$0xff] %v758
        %761 = vrot.lane.b32.xlu0 %v749, 16
        %v762 = vpop.permute.xlu0 %761
        %763 = vrot.lane.b32.xlu0 %v750, 16
        %v764 = vpop.permute.xlu0 %763
        %v765 = vsel %vm395, %v762, %v764
        %v766 = vsel %vm395, %v764, %v762
        %v767 = vmul.f32 %v766, %v402
        %v768 = vmul.f32 %v765, %v406
        %769 = vst [vmem:[#allocation2 + $0x10] sm:$0xff] %v767
        %770 = vst [vmem:[#allocation2 + $0x18] sm:$0xff] %v768
        %771 = vrot.lane.b32.xlu0 %v749, 15
        %v772 = vpop.permute.xlu0 %771
        %773 = vrot.lane.b32.xlu0 %v750, 15
        %v774 = vpop.permute.xlu0 %773
        %v775 = vsel %vm417, %v772, %v774
        %v776 = vsel %vm417, %v774, %v772
        %v777 = vmul.f32 %v776, %v424
        %v778 = vmul.f32 %v775, %v428
        %779 = vst [vmem:[#allocation2 + $0x20] sm:$0xff] %v777
        %780 = vst [vmem:[#allocation2 + $0x28] sm:$0xff] %v778
        %781 = vrot.lane.b32.xlu0 %v749, 1
        %v782 = vpop.permute.xlu0 %781
        %783 = vrot.lane.b32.xlu0 %v750, 1
        %v784 = vpop.permute.xlu0 %783
        %v785 = vsel %vm439, %v782, %v784
        %v786 = vsel %vm439, %v784, %v782
        %v787 = vmul.f32 %v786, %v446
        %v788 = vmul.f32 %v785, %v450
        %789 = vst [vmem:[#allocation2 + $0x30] sm:$0xff] %v787
        %790 = vst [vmem:[#allocation2 + $0x38] sm:$0xff] %v788
        %791 = vst [vmem:[#allocation2 + $0x40] sm:$0xff] %v749
        %792 = vst [vmem:[#allocation2 + $0x48] sm:$0xff] %v750
        %793 = vrot.lane.b32.xlu0 %v749, 127
        %v794 = vpop.permute.xlu0 %793
        %795 = vrot.lane.b32.xlu0 %v750, 127
        %v796 = vpop.permute.xlu0 %795
        %v797 = vsel %vm463, %v794, %v796
        %v798 = vsel %vm463, %v796, %v794
        %v799 = vmul.f32 %v797, %v470
        %v800 = vmul.f32 %v798, %v474
        %801 = vst [vmem:[#allocation2 + $0x50] sm:$0xff] %v799
        %802 = vst [vmem:[#allocation2 + $0x58] sm:$0xff] %v800
        %803 = vrot.lane.b32.xlu0 %v749, 113
        %v804 = vpop.permute.xlu0 %803
        %805 = vrot.lane.b32.xlu0 %v750, 113
        %v806 = vpop.permute.xlu0 %805
        %v807 = vsel %vm485, %v804, %v806
        %v808 = vsel %vm485, %v806, %v804
        %v809 = vmul.f32 %v807, %v492
        %v810 = vmul.f32 %v808, %v496
        %811 = vst [vmem:[#allocation2 + $0x60] sm:$0xff] %v809
        %812 = vst [vmem:[#allocation2 + $0x68] sm:$0xff] %v810
        %813 = vrot.lane.b32.xlu0 %v749, 112
        %v814 = vpop.permute.xlu0 %813
        %815 = vrot.lane.b32.xlu0 %v750, 112
        %v816 = vpop.permute.xlu0 %815
        %v817 = vsel %vm507, %v814, %v816
        %v818 = vsel %vm507, %v816, %v814
        %v819 = vmul.f32 %v817, %v514
        %v820 = vmul.f32 %v818, %v518
        %821 = vst [vmem:[#allocation2 + $0x70] sm:$0xff] %v819
        %822 = vst [vmem:[#allocation2 + $0x78] sm:$0xff] %v820
        %823 = vrot.lane.b32.xlu0 %v749, 111
        %v824 = vpop.permute.xlu0 %823
        %825 = vrot.lane.b32.xlu0 %v750, 111
        %v826 = vpop.permute.xlu0 %825
        %v827 = vsel %vm529, %v824, %v826
        %v828 = vsel %vm529, %v826, %v824
        %v829 = vmul.f32 %v827, %v536
        %v830 = vmul.f32 %v828, %v540
        %831 = vst [vmem:[#allocation2 + $0x80] sm:$0xff] %v829
        %832 = vst [vmem:[#allocation2 + $0x88] sm:$0xff] %v830
        %v833 = vld [vmem:[#allocation2] sm:$0xff]
        %v834 = vld [vmem:[#allocation2 + $0x8] sm:$0xff]
        %v835 = vld [vmem:[#allocation2 + $0x10] sm:$0xff]
        %v836 = vld [vmem:[#allocation2 + $0x18] sm:$0xff]
        %v837 = vld [vmem:[#allocation2 + $0x20] sm:$0xff]
        %v838 = vld [vmem:[#allocation2 + $0x28] sm:$0xff]
        %v839 = vld [vmem:[#allocation2 + $0x30] sm:$0xff]
        %v840 = vld [vmem:[#allocation2 + $0x38] sm:$0xff]
        %v841 = vld [vmem:[#allocation2 + $0x40] sm:$0xff]
        %v842 = vld [vmem:[#allocation2 + $0x48] sm:$0xff]
        %v843 = vld [vmem:[#allocation2 + $0x50] sm:$0xff]
        %v844 = vld [vmem:[#allocation2 + $0x58] sm:$0xff]
        %v845 = vld [vmem:[#allocation2 + $0x60] sm:$0xff]
        %v846 = vld [vmem:[#allocation2 + $0x68] sm:$0xff]
        %v847 = vld [vmem:[#allocation2 + $0x70] sm:$0xff]
        %v848 = vld [vmem:[#allocation2 + $0x78] sm:$0xff]
        %v849 = vld [vmem:[#allocation2 + $0x80] sm:$0xff]
        %v850 = vld [vmem:[#allocation2 + $0x88] sm:$0xff]
        %852 = vset.pattern.permute.xlu0 0
        %853 = vperm.xlu0 %852, %v347
        %v854 = vpop.permute.xlu0 %853
        %v857 = vsel %vm570, %v345, 0
        %859 = vmatprep.subr.mxu0 0.0
        %860 = vmatpush1.msra.mxu0 0.0
        %861 = vmatprep.subr.mxu0 0.0
        %862 = vmatpush1.msra.mxu0 0.0
        %863 = vmatprep.subr.mxu0 0.0
        %864 = vmatpush1.msra.mxu0 0.0
        %865 = vmatprep.subr.mxu0 0.0
        %866 = vmatpush1.msra.mxu0 0.0
        %867 = vmatprep.subr.mxu0 0.0
        %868 = vmatpush1.msra.mxu0 0.0
        %869 = vmatprep.subr.mxu0 0.0
        %870 = vmatpush1.msra.mxu0 0.0
        %871 = vmatprep.subr.mxu0 0.0
        %872 = vmatpush1.msra.mxu0 0.0
        %873 = vmatprep.subr.mxu0 %v850
        %874 = vmatpush1.msra.mxu0 %v849
        %875 = vmatprep.subr.mxu0 %v848
        %876 = vmatpush1.msra.mxu0 %v847
        %877 = vmatprep.subr.mxu0 %v846
        %878 = vmatpush1.msra.mxu0 %v845
        %879 = vmatprep.subr.mxu0 %v844
        %880 = vmatpush1.msra.mxu0 %v843
        %881 = vmatprep.subr.mxu0 %v842
        %882 = vmatpush1.msra.mxu0 %v841
        %883 = vmatprep.subr.mxu0 %v840
        %884 = vmatpush1.msra.mxu0 %v839
        %885 = vmatprep.subr.mxu0 %v838
        %886 = vmatpush1.msra.mxu0 %v837
        %887 = vmatprep.subr.mxu0 %v836
        %888 = vmatpush1.msra.mxu0 %v835
        %889 = vmatprep.subr.mxu0 %v834
        %890 = vmatpush1.msra.mxu0 %v833
        %891 = vmatprep.subr.mxu0 0.0
        %892 = vmatpush2.msra.mxu0 0.0
        %893 = vmatprep.subr.mxu0 0.0
        %894 = vmatpush2.msra.mxu0 0.0
        %895 = vmatprep.subr.mxu0 0.0
        %896 = vmatpush2.msra.mxu0 0.0
        %897 = vmatprep.subr.mxu0 0.0
        %898 = vmatpush2.msra.mxu0 0.0
        %899 = vmatprep.subr.mxu0 0.0
        %900 = vmatpush2.msra.mxu0 0.0
        %901 = vmatprep.subr.mxu0 0.0
        %902 = vmatpush2.msra.mxu0 0.0
        %903 = vmatprep.subr.mxu0 0.0
        %904 = vmatpush2.msra.mxu0 0.0
        %905 = vmatprep.subr.mxu0 0.0
        %906 = vmatpush2.msra.mxu0 0.0
        %907 = vmatprep.subr.mxu0 0.0
        %908 = vmatpush2.msra.mxu0 0.0
        %909 = vmatprep.subr.mxu0 0.0
        %910 = vmatpush2.msra.mxu0 0.0
        %911 = vmatprep.subr.mxu0 0.0
        %912 = vmatpush2.msra.mxu0 0.0
        %913 = vmatprep.subr.mxu0 0.0
        %914 = vmatpush2.msra.mxu0 0.0
        %915 = vmatprep.subr.mxu0 0.0
        %916 = vmatpush2.msra.mxu0 0.0
        %917 = vmatprep.subr.mxu0 0.0
        %918 = vmatpush2.msra.mxu0 0.0
        %919 = vmatprep.subr.mxu0 0.0
        %920 = vmatpush2.msra.mxu0 0.0
        %921 = vmatprep.subr.mxu0 0.0
        %922 = vmatpush2.msra.mxu0 0.0
        %923 = vmatprep.mubr.f32.mxu0 0.0
        %924 = vmatmul.mubr.f32.gmra.mxu0 %v857
        %v925 = vpop.f32.mrf.mxu0
        %v926 = vadd.f32 %v854, %v925
        %v927 = vpop.f32.mrf.mxu0
        %v928 = vadd.f32 %v854, %v927
        %929 = vdwg.mxu0
        %v930 = vmul.f32 %v926, 0.5
        %v931 = vmul.f32 %v928, 0.5
        %v932 = vadd.f32 %v365, %v930
        %v933 = vadd.f32 %v366, %v931
        %934 = vst [vmem:[%s338] sm:$0xff] %v932
        %935 = vst [vmem:[%s338 + $0x8] sm:$0xff] %v933
        %s936 = sand.u32 %s205, 1
        %s937 = scalar_lea.sflag [#allocation5], %s936
        %s938 = sand.u32 %s205, 1
        %s939 = smul.addr %s938, 16
        %s940 = scalar_lea.vmem [#allocation9], %s939
        // Predicated region
        $region65: #{tpu_custom_call.1} parent=51 // pred_check
          %p941 = pneg %p215
        $region66: #{tpu_custom_call.1} parent=51 // pred_check_branch
          %943 = sbr.rel (%p941) target = $region68
        $region67: #{tpu_custom_call.1} parent=51 // pred_region
          %s945 = ssub.s32 256, 256
          %946 = vsyncadd %s937, %s945
          %s947 = smul.addr %s24, 2
          %s948 = smul.addr %s947, 128
          %s949 = scalar_lea.hbm %s8, %s948
          %s951 = sshll.u32 %s940, 4
          %s952 = int_to_ptr.vmem [resolvable:$true] %s951
          %954 = dma.vmem_to_hbm [thread:$0]  %s952, 256, %s949, %s937
        $region68: #{tpu_custom_call.1} parent=51 // pred_fallthru
          _
      $region52: #{tpu_custom_call.1} parent=5 // pred_fallthru
        _
      %p955 = scmp.le.s32.totalorder 2, %s19
      // Predicated region
      $region69: #{tpu_custom_call.1} parent=5 // pred_check
        %p956 = pneg %p955
      $region70: #{tpu_custom_call.1} parent=5 // pred_check_branch
        %958 = sbr.rel (%p956) target = $region72
      $region71: #{tpu_custom_call.1} parent=5 // pred_region
        %s959 = ssub.s32 %s19, 2
        // Predicated region
        $region73: #{tpu_custom_call.1} parent=71 // pred_check
          %p960 = pneg %p221
        $region74: #{tpu_custom_call.1} parent=71 // pred_check_branch
          %962 = sbr.rel (%p960) target = $region76
        $region75: #{tpu_custom_call.1} parent=71 // pred_region
          %s963 = sand.u32 %s206, 1
          %s964 = scalar_lea.sflag [#allocation5], %s963
          %s965 = sand.u32 %s206, 1
          %s966 = smul.addr %s965, 16
          %s967 = scalar_lea.vmem [#allocation9], %s966
          %968 = dma.done %s964, 256
        $region76: #{tpu_custom_call.1} parent=71 // pred_fallthru
          _
      $region72: #{tpu_custom_call.1} parent=5 // pred_fallthru
        _
    $region6: #{tpu_custom_call.1} parent=1 // loop_footer
      %s23 = sadd.s32 1, %s19
    $region7: #{tpu_custom_call.1} parent=1 // loop_footer_branch
      %18 = sbr.rel target = $region3
    $region8: #{tpu_custom_call.1} parent=1 // loop_exit
      _
    %969 = vsyncpa [#allocation4], 1
    %s970 = scalar_lea.sflag [#allocation4], 1
    %971 = vsyncpa %s970, 1
    %972 = vsyncpa [#allocation7], 1
    %973 = vsyncpa [#allocation5], 1
    %s974 = scalar_lea.sflag [#allocation5], 1
    %975 = vsyncpa %s974, 1

</llo_original>
